<compile_context>
chip_gen: v7x
topology: tpu7x:2x2x1
jax: 0.10.0
libtpu: 0.0.40
codegen_flags: <defaults>
</compile_context>

<pallas_src>
import functools

import jax
import jax.numpy as jnp
from jax.experimental import pallas as pl
from jax.experimental.pallas import tpu as pltpu


LANE = 128
_VMEM = pl.BlockSpec(memory_space=pltpu.MemorySpace.VMEM)

# activation0 == nn.Sequential() == identity in this module.  The folded fast path and
# the host-side bias folding are only valid while this holds.
_ACTIVATION0_IS_IDENTITY = True


def _round_up(v, m):
    return (v + m - 1) // m * m


def _pick_tk(in_nodes):
    """Largest K-tile (from a ladder) that gives >= 2 reduction steps; else whole."""
    for cand in (8192, 4096, 2048, 1024, 512, 256, 128):
        if in_nodes % cand == 0 and in_nodes // cand >= 2:
            return cand
    return in_nodes


# ----------------------------------------------------------------------------
# Pallas kernels
# ----------------------------------------------------------------------------
def _fused_fgl_fc_kernel(x_ref, fglw_ref, fcw_ref, fcb_ref, o_ref, *, out_nodes, c_out):
    """FGL -> identity -> weight-normed Linear, fused, one pallas_call.

    x    : (N, in_nodes)        f32
    fglw : (1, C*J)             f32   weight-normed FGL weight, flattened [c*J + j]
    fcw  : (C*J, Kp)            bf16  fc.weight.T, classes lane-padded to 128
    fcb  : (1, Kp)              f32   fc bias + folded FGL-bias contribution
    o    : (N, Kp)              f32   lane-dense padded logits
    """
    in_nodes = x_ref.shape[1]
    group = in_nodes // out_nodes

    # FGL group-sum pooling.  Synthetic strided grouping: node j <- inputs {g*J + j}.
    # Static 128-aligned lane slices summed on the VPU -- no adjacency matrix is
    # DMA'd or multiplied, and x keeps full f32 precision.
    pooled = x_ref[:, 0:out_nodes]
    for g in range(1, group):                       # static unroll, tiny (group == 2 at toy)
        pooled = pooled + x_ref[:, g * out_nodes:(g + 1) * out_nodes]

    # FGL per-(channel, node) scale: z[n, c*J + j] = pooled[n, j] * fgl_w[c, j].
    # The FGL bias is input-independent and folded into fcb host-side.
    z = jnp.concatenate([pooled] * c_out, axis=-1) * fglw_ref[...]      # (N, C*J) f32

    # activation0 == identity.
    # TODO(synk): a non-identity activation would go here and would also require
    # adding fgl_b back before the activation instead of folding it into fcb.

    # Single long-K bf16 MXU contraction (instead of 16 tiny M=8 matmuls); f32 accumulate.
    logits = jnp.dot(z.astype(jnp.bfloat16), fcw_ref[...],
                     preferred_element_type=jnp.float32)                # (N, Kp)
    o_ref[...] = logits + fcb_ref[...]


def _folded_kernel(x_ref, wf_ref, bf_ref, o_ref, acc_ref):
    """Fully folded fast path (valid only because activation0 is identity).

    Gridded: (batch tiles "parallel") x (K tiles over in_nodes, "arbitrary", last).
    x   : (tn, tk)     f32   batch/K tile of the input
    wf  : (tk, Kp)     bf16  K tile of  adj_t @ (sum_c fgl_w[c] (.) fc_w_t[c-block])
    bf  : (1, Kp)      f32   fc_b + folded FGL-bias contribution
    o   : (tn, Kp)     f32
    acc : (tn, Kp)     f32   VMEM accumulator, persists across the K axis
    """
    k = pl.program_id(1)

    @pl.when(k == 0)
    def _():
        acc_ref[...] = jnp.zeros_like(acc_ref)

    # bf16 weight stream (halves the dominant HBM DMA); the small x tile is cast to
    # bf16 so the MXU runs at native bf16 rate; accumulation stays f32.
    acc_ref[...] += jnp.dot(x_ref[...].astype(jnp.bfloat16), wf_ref[...],
                            preferred_element_type=jnp.float32)

    @pl.when(k == pl.num_programs(1) - 1)
    def _():
        o_ref[...] = acc_ref[...] + bf_ref[...]


# ----------------------------------------------------------------------------
# Jitted forward wrappers (single jit each; logits sliced back to n_classes)
# ----------------------------------------------------------------------------
@functools.partial(jax.jit, static_argnames=("n_classes",))
def c16_forward_fused(x, params, n_classes):
    """General path: FGL -> activation -> weight-normed Linear, one pallas_call."""
    N, in_nodes = x.shape
    c_out, out_nodes = params["fgl_w"].shape
    kp = params["b_fused"].shape[-1]
    F = c_out * out_nodes

    flops = 2 * N * F * kp + N * in_nodes + N * F
    bytes_accessed = (x.size * 4 + params["fglw_flat"].size * 4
                      + params["fcw_flat_bf16"].size * 2
                      + params["b_fused"].size * 4 + N * kp * 4)

    kern = functools.partial(_fused_fgl_fc_kernel, out_nodes=out_nodes, c_out=c_out)
    logits_pad = pl.pallas_call(
        kern,
        out_shape=jax.ShapeDtypeStruct((N, kp), jnp.float32),
        in_specs=[_VMEM] * 4,
        out_specs=_VMEM,
        compiler_params=pltpu.CompilerParams(vmem_limit_bytes=32 * 1024 * 1024),
        cost_estimate=pl.CostEstimate(flops=flops, transcendentals=0,
                                      bytes_accessed=bytes_accessed),
    )(x, params["fglw_flat"], params["fcw_flat_bf16"], params["b_fused"])
    return logits_pad[:, :n_classes]


@functools.partial(jax.jit, static_argnames=("n_classes",))
def c16_forward_folded(x, params, n_classes):
    """Fast path: single streamed matmul + bias.  Valid only for identity activation0."""
    assert _ACTIVATION0_IS_IDENTITY, "folded path requires activation0 == identity"
    N, in_nodes = x.shape
    kp = params["b_fused"].shape[-1]
    w = params["w_fused_bf16"]
    b = params["b_fused"]

    tn = N if N <= 128 else (128 if N % 128 == 0 else N)
    tk = _pick_tk(in_nodes)
    grid = (N // tn, in_nodes // tk)

    flops = 2 * N * in_nodes * kp
    bytes_accessed = x.size * 4 + w.size * 2 + b.size * 4 + N * kp * 4

    logits_pad = pl.pallas_call(
        _folded_kernel,
        out_shape=jax.ShapeDtypeStruct((N, kp), jnp.float32),
        grid=grid,
        in_specs=[
            pl.BlockSpec((tn, tk), lambda i, k: (i, k)),
            pl.BlockSpec((tk, kp), lambda i, k: (k, 0)),
            pl.BlockSpec((1, kp), lambda i, k: (0, 0)),
        ],
        out_specs=pl.BlockSpec((tn, kp), lambda i, k: (i, 0)),
        scratch_shapes=[pltpu.VMEM((tn, kp), jnp.float32)],
        compiler_params=pltpu.CompilerParams(
            dimension_semantics=("parallel", "arbitrary"),
            vmem_limit_bytes=32 * 1024 * 1024,
        ),
        cost_estimate=pl.CostEstimate(flops=flops, transcendentals=0,
                                      bytes_accessed=bytes_accessed),
    )(x, w, b)
    return logits_pad[:, :n_classes]


# Default forward = folded fast path (activation0 is identity in this module).
c16_smaller_classifier_forward = c16_forward_folded


# ----------------------------------------------------------------------------
# Deterministic parameter / adjacency construction (host-side glue, plain JAX)
# ----------------------------------------------------------------------------
def make_params(key, in_nodes, out_nodes, c_out, n_classes):
    assert in_nodes % out_nodes == 0, "synthetic grouping needs in_nodes % out_nodes == 0"
    assert out_nodes % LANE == 0
    k1, k2, k3, k4, k5, k6 = jax.random.split(key, 6)

    # Synthetic wavelet-tree grouping (strided): input i -> output node (i % out_nodes).
    # Lane-aligned so the kernel pools with static slices instead of a dense adjacency.
    rows = jnp.arange(in_nodes)
    adj_t = (jnp.zeros((in_nodes, out_nodes), jnp.float32)
             .at[rows, rows % out_nodes].set(1.0))

    # FGL weight with weight_norm reparameterization (norm over the node dim).
    fgl_v = jax.random.normal(k1, (c_out, out_nodes), jnp.float32) * 0.05
    fgl_g = jax.random.normal(k2, (c_out, 1), jnp.float32) * 0.1 + 1.0
    fgl_w = fgl_g * fgl_v / (jnp.linalg.norm(fgl_v, axis=1, keepdims=True) + 1e-12)
    fgl_b = jax.random.normal(k3, (c_out, out_nodes), jnp.float32) * 0.01

    # Weight-normed Linear (PyTorch weight_norm default dim=0 -> per-output-row norm).
    F = c_out * out_nodes
    fc_v = jax.random.normal(k4, (n_classes, F), jnp.float32) * 0.02
    fc_g = jax.random.normal(k5, (n_classes, 1), jnp.float32) * 0.1 + 1.0
    fc_w = fc_g * fc_v / (jnp.linalg.norm(fc_v, axis=1, keepdims=True) + 1e-12)
    fc_b = jax.random.normal(k6, (n_classes,), jnp.float32) * 0.01

    # --- Kernel-friendly layouts --------------------------------------------------
    kp = _round_up(n_classes, LANE)                       # lane-dense class dim (10 -> 128)
    fc_w_t = fc_w.T                                       # (F, K), row index = c*J + j
    fcw_flat_pad = jnp.zeros((F, kp), jnp.float32).at[:, :n_classes].set(fc_w_t)
    fc_b_pad = jnp.zeros((1, kp), jnp.float32).at[0, :n_classes].set(fc_b)

    fglw_flat = fgl_w.reshape(1, F)                       # (1, C*J)
    fglb_flat = fgl_b.reshape(1, F)

    # Fold the input-independent FGL-bias term into the fc bias (identity activation).
    b_fused = fc_b_pad + fglb_flat @ fcw_flat_pad         # (1, Kp), f32

    # Folded weights (valid ONLY because activation0 is identity):
    #   logits = (x @ adj_t * fgl_w).flatten @ fc_w_t + ...  = x @ (adj_t @ w_mix) + b_fused
    w_mix = jnp.einsum("cj,cjk->jk", fgl_w, fcw_flat_pad.reshape(c_out, out_nodes, kp))
    w_fused = adj_t @ w_mix                               # (in_nodes, Kp), f32

    return {
        # reference parameters (f32)
        "adj_t": adj_t,
        "fgl_w": fgl_w,
        "fgl_b": fgl_b,
        "fc_w_t": fc_w_t,
        "fc_b": fc_b,
        # fused-kernel parameters
        "fglw_flat": fglw_flat,                           # (1, C*J) f32
        "fcw_flat_bf16": fcw_flat_pad.astype(jnp.bfloat16),  # (C*J, Kp) bf16 weight stream
        # shared / folded-kernel parameters
        "b_fused": b_fused,                               # (1, Kp) f32
        "w_fused_bf16": w_fused.astype(jnp.bfloat16),     # (in_nodes, Kp) bf16 weight stream
    }


def reference_forward(x, params):
    """Plain-JAX reference mirroring the assumed module math (f32 throughout)."""
    pooled = x @ params["adj_t"]                                      # (N, out_nodes)
    y = pooled[:, None, :] * params["fgl_w"][None] + params["fgl_b"][None]
    z = y.reshape(x.shape[0], -1)                                     # == .view(N, -1)
    return z @ params["fc_w_t"] + params["fc_b"][None, :]


# ----------------------------------------------------------------------------
if __name__ == "__main__":
    # Module-fixed structure: channel_sizes = [1, 16], node_sizes = [in_features, 1024].
    # in_features (constants.original_masked_nnz, ~2e5 voxels) is toy-shrunk to 2048;
    # out_nodes = 1024 and c_out = 16 match the module exactly; n_classes = 10 toy.
    N, IN_NODES, OUT_NODES, C_OUT, N_CLASSES = 8, 2048, 1024, 16, 10

    key = jax.random.PRNGKey(0)
    kx, kparams = jax.random.split(key)
    x = jax.random.normal(kx, (N, IN_NODES), jnp.float32)
    params = make_params(kparams, IN_NODES, OUT_NODES, C_OUT, N_CLASSES)

    ref = reference_forward(x, params)

    folded = jax.block_until_ready(c16_forward_folded(x, params, n_classes=N_CLASSES))
    fused = jax.block_until_ready(c16_forward_fused(x, params, n_classes=N_CLASSES))

    assert folded.shape == (N, N_CLASSES)
    assert fused.shape == (N, N_CLASSES)
    # Kernels stream weights in bf16 (review: halve the dominant HBM DMA), so compare
    # against the f32 reference at a bf16-level tolerance (expected drift ~1e-3).
    assert jnp.allclose(folded, ref, atol=1e-2, rtol=5e-2), "folded kernel mismatch"
    assert jnp.allclose(fused, ref, atol=1e-2, rtol=5e-2), "fused kernel mismatch"

    print("KERNEL_OK")
</pallas_src>

<mosaic_0001>
module attributes {stable_mosaic.version = 11 : i64} {
  func.func @_folded_kernel(%arg0: i32, %arg1: i32, %arg2: memref<8x1024xf32, #tpu.memory_space<vmem>>, %arg3: memref<1024x128xbf16, #tpu.memory_space<vmem>>, %arg4: memref<1x128xf32, #tpu.memory_space<vmem>>, %arg5: memref<8x128xf32, #tpu.memory_space<vmem>>, %arg6: memref<8x128xf32, #tpu.memory_space<vmem>>) attributes {dimension_semantics = [#tpu.dimension_semantics<parallel>, #tpu.dimension_semantics<arbitrary>], iteration_bounds = array<i64: 1, 2>, scalar_prefetch = 0 : i64, scratch_operands = 1 : i64, tpu.core_type = #tpu.core_type<tc>, window_params = [{transform_indices = @transform_0, window_bounds = array<i64: 8, 1024>}, {transform_indices = @transform_1, window_bounds = array<i64: 1024, 128>}, {pipeline_mode = #tpu.pipeline_mode<synchronous>, transform_indices = @transform_2, window_bounds = array<i64: 1, 128>}, {transform_indices = @transform_3, window_bounds = array<i64: 8, 128>}]} {
    %c0_i32 = arith.constant 0 : i32
    %0 = arith.cmpi eq, %arg1, %c0_i32 : i32
    %1 = arith.extui %0 : i1 to i32
    %c0_i32_0 = arith.constant 0 : i32
    %2 = arith.cmpi ne, %1, %c0_i32_0 : i32
    scf.if %2 {
      %cst_9 = arith.constant 0.000000e+00 : f32
      %13 = vector.broadcast %cst_9 : f32 to vector<8x128xf32>
      %c0_10 = arith.constant 0 : index
      %c0_11 = arith.constant 0 : index
      %14 = vector.load %arg6[%c0_10, %c0_11] : memref<8x128xf32, #tpu.memory_space<vmem>>, vector<8x128xf32>
      tpu.vector_store %arg6[%c0_10, %c0_11], %13 {strides = array<i32>} : memref<8x128xf32, #tpu.memory_space<vmem>>, vector<8x128xf32>,
    } else {
    }
    %c0 = arith.constant 0 : index
    %c0_1 = arith.constant 0 : index
    %3 = vector.load %arg6[%c0, %c0_1] : memref<8x128xf32, #tpu.memory_space<vmem>>, vector<8x128xf32>
    %c0_2 = arith.constant 0 : index
    %c0_3 = arith.constant 0 : index
    %4 = vector.load %arg2[%c0_2, %c0_3] : memref<8x1024xf32, #tpu.memory_space<vmem>>, vector<8x1024xf32>
    %5 = arith.truncf %4 : vector<8x1024xf32> to vector<8x1024xbf16>
    %c0_4 = arith.constant 0 : index
    %c0_5 = arith.constant 0 : index
    %6 = vector.load %arg3[%c0_4, %c0_5] : memref<1024x128xbf16, #tpu.memory_space<vmem>>, vector<1024x128xbf16>
    %cst = arith.constant dense<0.000000e+00> : vector<8x128xf32>
    %7 = tpu.matmul %5, %6, %cst {dimension_numbers = #tpu.dot_dimension_numbers<[1], [0], [0], [1], [0, 0, 1, 1], [], []>} : vector<8x1024xbf16>, vector<1024x128xbf16>, vector<8x128xf32> -> vector<8x128xf32>
    %8 = arith.addf %3, %7 : vector<8x128xf32>
    %c0_6 = arith.constant 0 : index
    %c0_7 = arith.constant 0 : index
    %9 = vector.load %arg6[%c0_6, %c0_7] : memref<8x128xf32, #tpu.memory_space<vmem>>, vector<8x128xf32>
    tpu.vector_store %arg6[%c0_6, %c0_7], %8 {strides = array<i32>} : memref<8x128xf32, #tpu.memory_space<vmem>>, vector<8x128xf32>,
    %c1_i32 = arith.constant 1 : i32
    %10 = arith.cmpi eq, %arg1, %c1_i32 : i32
    %11 = arith.extui %10 : i1 to i32
    %c0_i32_8 = arith.constant 0 : i32
    %12 = arith.cmpi ne, %11, %c0_i32_8 : i32
    scf.if %12 {
      %c0_9 = arith.constant 0 : index
      %c0_10 = arith.constant 0 : index
      %13 = vector.load %arg6[%c0_9, %c0_10] : memref<8x128xf32, #tpu.memory_space<vmem>>, vector<8x128xf32>
      %c0_11 = arith.constant 0 : index
      %c0_12 = arith.constant 0 : index
      %14 = vector.load %arg4[%c0_11, %c0_12] : memref<1x128xf32, #tpu.memory_space<vmem>>, vector<1x128xf32>
      %15 = vector.broadcast %14 : vector<1x128xf32> to vector<8x128xf32>
      %16 = arith.addf %13, %15 : vector<8x128xf32>
      %c0_13 = arith.constant 0 : index
      %c0_14 = arith.constant 0 : index
      %17 = vector.load %arg5[%c0_13, %c0_14] : memref<8x128xf32, #tpu.memory_space<vmem>>, vector<8x128xf32>
      tpu.vector_store %arg5[%c0_13, %c0_14], %16 {strides = array<i32>} : memref<8x128xf32, #tpu.memory_space<vmem>>, vector<8x128xf32>,
    } else {
    }
    return
  }
  func.func @transform_0(%arg0: i32, %arg1: i32) -> (i32, i32) {
    %c0_i32 = arith.constant 0 : i32
    return %arg0, %arg1 : i32, i32
  }
  func.func @transform_1(%arg0: i32, %arg1: i32) -> (i32, i32) {
    %c0_i32 = arith.constant 0 : i32
    %c0_i32_0 = arith.constant 0 : i32
    return %arg1, %c0_i32 : i32, i32
  }
  func.func @transform_2(%arg0: i32, %arg1: i32) -> (i32, i32) {
    %c0_i32 = arith.constant 0 : i32
    %c0_i32_0 = arith.constant 0 : i32
    %c0_i32_1 = arith.constant 0 : i32
    return %c0_i32, %c0_i32_0 : i32, i32
  }
  func.func @transform_3(%arg0: i32, %arg1: i32) -> (i32, i32) {
    %c0_i32 = arith.constant 0 : i32
    %c0_i32_0 = arith.constant 0 : i32
    return %arg0, %c0_i32 : i32, i32
  }
}

</mosaic_0001>

<llo_original>
// kernel: c16_forward_folded.1
$region0: #{c16_forward_folded.1}
  #allocation0 [shape = 'u32[]', space=smem, size = 0x4, offset = 0x4, fixed_abs, tag = 'smem constant byte address 0x4 - core index']
  #allocation1 [shape = 'u32[144,128]{1,0:T(1,128)}', space=vmem, size = 0x12000, scoped, tag = 'internal scratch']
  #allocation2 [shape = 'f32[8,128]{1,0:T(8,128)}', space=vmem, size = 0x1000, scoped, tag = 'scratch operand']
  %s0 = inlined_call_operand.hbm [shape: f32[8,2048], index: 0, kind: input, shape index: {}]
  %s1 = inlined_call_operand.hbm [shape: bf16[2048,128], index: 1, kind: input, shape index: {}]
  %s2 = inlined_call_operand.vmem [shape: f32[1,128], index: 2, kind: input, shape index: {}]
  %s3 = inlined_call_operand.hbm [shape: f32[8,128], index: 3, kind: output, shape index: {}]
  %s4 = sld [smem:[#allocation0]]
  $region61: #{c16_forward_folded.1} parent=0
    _
  %s6 = ssub.s32 1, %s4
  %s7 = scalar_select 0, %s6, %s4
  $region1: #{c16_forward_folded.1} parent=0
    #allocation3 [shape = 'u8[65536]{0}', space=vmem, size = 0x10000, scoped, tag = 'input window, operand 0']
    #allocation4 [shape = 's32[2]{0}', space=sflag, size = 0x8, scoped, tag = 'scoped memory for c16_forward_folded.1']
    #allocation5 [shape = 's32[2]{0}', space=sflag, size = 0x8, scoped, tag = 'scoped memory for c16_forward_folded.1']
    #allocation6 [shape = 'u8[524288]{0}', space=vmem, size = 0x80000, scoped, tag = 'input window, operand 1']
    #allocation7 [shape = 's32[2]{0}', space=sflag, size = 0x8, scoped, tag = 'scoped memory for c16_forward_folded.1']
    #allocation8 [shape = 'u8[4096]{0}', space=vmem, size = 0x1000, scoped, tag = 'output window, operand 0, single buffered']
    %8 = vsyncpa [#allocation4], 0
    %s9 = scalar_lea.sflag [#allocation4], 1
    %10 = vsyncpa %s9, 0
    %11 = vsyncpa [#allocation7], 0
    %s12 = scalar_lea.sflag [#allocation7], 1
    %13 = vsyncpa %s12, 0
    %14 = vsyncpa [#allocation5], 0
    loop: start=0, step=1, limit=4
    $region2: #{c16_forward_folded.1} parent=1 // loop_pre_header
      _
    $region3: #{c16_forward_folded.1} parent=1 // loop_header
      %s16 = sphi 0, %s20
      %p17 = scmp.ge.s32.totalorder %s16, 4
      %s23 = sphi 0, %s35
      %s24 = sphi 0, %s31
      %s25 = sphi 0, %s23
      %s26 = sphi 0, %s24
      %s27 = sphi 0, %s25
      %s28 = sphi 0, %s26
      %s40 = sphi 0, %s42
      %s43 = sphi 0, %s40
      %s44 = sphi 0, %s43
      %s60 = sphi 0, %s44
      %s66 = sphi 0, %s68
      %s69 = sphi 0, %s66
      %s70 = sphi 0, %s69
      %s86 = sphi 0, %s70
      %s90 = sphi 0, %s90
      %s92 = sphi 0, %s90
      %s93 = sphi 0, %s92
      %s107 = sphi 0, %s93
      %s113 = sphi 0, %s115
      %s116 = sphi 0, %s113
      %s117 = sphi 0, %s116
      %s133 = sphi 0, %s117
    $region4: #{c16_forward_folded.1} parent=1 // loop_header_branch
      %19 = sbr.rel (%p17) target = $region8
    $region5: #{c16_forward_folded.1} parent=1 // loop_body
      %s21 = ssub.s32 %s16, 1
      %s22 = ssub.s32 %s16, 2
      %s29 = sadd.s32 1, %s24
      %p30 = scmp.ge.s32.totalorder %s29, 2
      %s31 = scalar_select %p30, 0, %s29
      %s32 = sadd.s32 1, %s23
      %s33 = scalar_select %p30, %s32, %s23
      %p34 = scmp.ge.s32.totalorder %s33, 1
      %s35 = scalar_select %p34, 0, %s33
      %s36 = ssub.s32 %s23, %s35
      %s37 = ssub.s32 %s24, %s31
      %s38 = sor.u32 %s36, %s37
      %p39 = scmp.eq.s32.totalorder %s38, 0
      %s41 = sadd.s32 %s40, 1
      %s42 = scalar_select %p39, %s40, %s41
      %p45 = pneg %p39
      %p46 = scmp.eq.s32.totalorder %s16, 1
      %p47 = por %p45, %p46
      %p48 = scmp.ne.s32.totalorder %s40, %s43
      %p49 = scmp.eq.s32.totalorder %s16, 0
      %p50 = por %p48, %p49
      %p51 = scmp.ne.s32.totalorder %s40, %s43
      %p52 = scmp.eq.s32.totalorder %s21, 1
      %p53 = por %p51, %p52
      %p54 = scmp.ne.s32.totalorder %s43, %s44
      %p55 = scmp.eq.s32.totalorder %s21, 0
      %p56 = por %p54, %p55
      %p57 = scmp.ne.s32.totalorder %s43, %s44
      %p58 = scmp.eq.s32.totalorder %s22, 1
      %p59 = por %p57, %p58
      %p61 = scmp.ne.s32.totalorder %s44, %s60
      %p62 = scmp.eq.s32.totalorder %s22, 0
      %p63 = por %p61, %p62
      %s64 = ssub.s32 %s24, %s31
      %p65 = scmp.eq.s32.totalorder %s64, 0
      %s67 = sadd.s32 %s66, 1
      %s68 = scalar_select %p65, %s66, %s67
      %p71 = pneg %p65
      %p72 = scmp.eq.s32.totalorder %s16, 1
      %p73 = por %p71, %p72
      %p74 = scmp.ne.s32.totalorder %s66, %s69
      %p75 = scmp.eq.s32.totalorder %s16, 0
      %p76 = por %p74, %p75
      %p77 = scmp.ne.s32.totalorder %s66, %s69
      %p78 = scmp.eq.s32.totalorder %s21, 1
      %p79 = por %p77, %p78
      %p80 = scmp.ne.s32.totalorder %s69, %s70
      %p81 = scmp.eq.s32.totalorder %s21, 0
      %p82 = por %p80, %p81
      %p83 = scmp.ne.s32.totalorder %s69, %s70
      %p84 = scmp.eq.s32.totalorder %s22, 1
      %p85 = por %p83, %p84
      %p87 = scmp.ne.s32.totalorder %s70, %s86
      %p88 = scmp.eq.s32.totalorder %s22, 0
      %p89 = por %p87, %p88
      %s91 = sadd.s32 %s90, 1
      %p94 = scmp.eq.s32.totalorder %s16, 1
      %p95 = scmp.ne.s32.totalorder %s90, %s92
      %p96 = scmp.eq.s32.totalorder %s16, 0
      %p97 = por %p95, %p96
      %p98 = scmp.ne.s32.totalorder %s90, %s92
      %p99 = scmp.eq.s32.totalorder %s21, 1
      %p100 = por %p98, %p99
      %p101 = scmp.ne.s32.totalorder %s92, %s93
      %p102 = scmp.eq.s32.totalorder %s21, 0
      %p103 = por %p101, %p102
      %p104 = scmp.ne.s32.totalorder %s92, %s93
      %p105 = scmp.eq.s32.totalorder %s22, 1
      %p106 = por %p104, %p105
      %p108 = scmp.ne.s32.totalorder %s93, %s107
      %p109 = scmp.eq.s32.totalorder %s22, 0
      %p110 = por %p108, %p109
      %s111 = ssub.s32 %s23, %s35
      %p112 = scmp.eq.s32.totalorder %s111, 0
      %s114 = sadd.s32 %s113, 1
      %s115 = scalar_select %p112, %s113, %s114
      %p118 = pneg %p112
      %p119 = scmp.eq.s32.totalorder %s16, 1
      %p120 = por %p118, %p119
      %p121 = scmp.ne.s32.totalorder %s113, %s116
      %p122 = scmp.eq.s32.totalorder %s16, 0
      %p123 = por %p121, %p122
      %p124 = scmp.ne.s32.totalorder %s113, %s116
      %p125 = scmp.eq.s32.totalorder %s21, 1
      %p126 = por %p124, %p125
      %p127 = scmp.ne.s32.totalorder %s116, %s117
      %p128 = scmp.eq.s32.totalorder %s21, 0
      %p129 = por %p127, %p128
      %p130 = scmp.ne.s32.totalorder %s116, %s117
      %p131 = scmp.eq.s32.totalorder %s22, 1
      %p132 = por %p130, %p131
      %p134 = scmp.ne.s32.totalorder %s117, %s133
      %p135 = scmp.eq.s32.totalorder %s22, 0
      %p136 = por %p134, %p135
      %p137 = scmp.le.s32.totalorder 1, %s16
      %p138 = scmp.lt.s32.totalorder %s16, 3
      %p139 = pnand %p137, %p138
      %p140 = pneg %p139
      // Predicated region
      $region9: #{c16_forward_folded.1} parent=5 // pred_check
        _
      $region10: #{c16_forward_folded.1} parent=5 // pred_check_branch
        %142 = sbr.rel (%p139) target = $region12
      $region11: #{c16_forward_folded.1} parent=5 // pred_region
        %s143 = ssub.s32 %s16, 1
        // Predicated region
        $region13: #{c16_forward_folded.1} parent=11 // pred_check
          %p144 = pneg %p103
        $region14: #{c16_forward_folded.1} parent=11 // pred_check_branch
          %146 = sbr.rel (%p144) target = $region16
        $region15: #{c16_forward_folded.1} parent=11 // pred_region
          _
        $region16: #{c16_forward_folded.1} parent=11 // pred_fallthru
          _
      $region12: #{c16_forward_folded.1} parent=5 // pred_fallthru
        _
      %p147 = scmp.lt.s32.totalorder %s16, 2
      // Predicated region
      $region17: #{c16_forward_folded.1} parent=5 // pred_check
        %p148 = pneg %p147
      $region18: #{c16_forward_folded.1} parent=5 // pred_check_branch
        %150 = sbr.rel (%p148) target = $region20
      $region19: #{c16_forward_folded.1} parent=5 // pred_region
        // Predicated region
        $region21: #{c16_forward_folded.1} parent=19 // pred_check
          %p151 = pneg %p50
        $region22: #{c16_forward_folded.1} parent=19 // pred_check_branch
          %153 = sbr.rel (%p151) target = $region24
        $region23: #{c16_forward_folded.1} parent=19 // pred_region
          %s154 = sand.u32 %s40, 1
          %s155 = scalar_lea.sflag [#allocation4], %s154
          %s156 = sand.u32 %s40, 1
          %s157 = smul.addr %s156, 64
          %s158 = scalar_lea.vmem [#allocation3], %s157
          %s159 = smul.u32 8, %s24
          %s161 = ssub.s32 1024, 1024
          %162 = vsyncadd %s155, %s161
          %s163 = smul.addr %s23, 16
          %s164 = sadd.s32 %s159, %s163
          %s165 = smul.addr %s164, 128
          %s166 = scalar_lea.hbm %s0, %s165
          %s168 = sshll.u32 %s158, 4
          %s169 = int_to_ptr.vmem [resolvable:$true] %s168
          %171 = dma.hbm_to_vmem [thread:$0]  %s166, 1024, %s169, %s155
        $region24: #{c16_forward_folded.1} parent=19 // pred_fallthru
          _
        // Predicated region
        $region25: #{c16_forward_folded.1} parent=19 // pred_check
          %p172 = pneg %p76
        $region26: #{c16_forward_folded.1} parent=19 // pred_check_branch
          %174 = sbr.rel (%p172) target = $region28
        $region27: #{c16_forward_folded.1} parent=19 // pred_region
          %s175 = sand.u32 %s66, 1
          %s176 = scalar_lea.sflag [#allocation7], %s175
          %s177 = sand.u32 %s66, 1
          %s178 = smul.addr %s177, 512
          %s179 = scalar_lea.vmem [#allocation6], %s178
          %s180 = smul.u32 128, %s24
          %s182 = ssub.s32 8192, 8192
          %183 = vsyncadd %s176, %s182
          %s184 = smul.addr %s180, 64
          %s185 = scalar_lea.hbm %s1, %s184
          %s186 = sshll.u32 %s179, 4
          %s187 = int_to_ptr.vmem [resolvable:$true] %s186
          %192 = dma.hbm_to_vmem [thread:$0]  %s185, 8192, %s187, %s176, 64, 64, 4
        $region28: #{c16_forward_folded.1} parent=19 // pred_fallthru
          _
      $region20: #{c16_forward_folded.1} parent=5 // pred_fallthru
        _
      %p193 = scmp.le.s32.totalorder 1, %s16
      %p194 = scmp.lt.s32.totalorder %s16, 3
      %p195 = pnand %p193, %p194
      %p196 = pneg %p195
      // Predicated region
      $region29: #{c16_forward_folded.1} parent=5 // pred_check
        _
      $region30: #{c16_forward_folded.1} parent=5 // pred_check_branch
        %198 = sbr.rel (%p195) target = $region32
      $region31: #{c16_forward_folded.1} parent=5 // pred_region
        %s199 = ssub.s32 %s16, 1
        %s200 = sand.u32 %s43, 1
        %s201 = scalar_lea.sflag [#allocation4], %s200
        %s202 = sand.u32 %s43, 1
        %s203 = smul.addr %s202, 64
        %s204 = scalar_lea.vmem [#allocation3], %s203
        // Predicated region
        $region33: #{c16_forward_folded.1} parent=31 // pred_check
          %p205 = pneg %p56
        $region34: #{c16_forward_folded.1} parent=31 // pred_check_branch
          %207 = sbr.rel (%p205) target = $region36
        $region35: #{c16_forward_folded.1} parent=31 // pred_region
          %208 = dma.done %s201, 1024
        $region36: #{c16_forward_folded.1} parent=31 // pred_fallthru
          _
        %s209 = sand.u32 %s69, 1
        %s210 = scalar_lea.sflag [#allocation7], %s209
        %s211 = sand.u32 %s69, 1
        %s212 = smul.addr %s211, 512
        %s213 = scalar_lea.vmem [#allocation6], %s212
        // Predicated region
        $region37: #{c16_forward_folded.1} parent=31 // pred_check
          %p214 = pneg %p82
        $region38: #{c16_forward_folded.1} parent=31 // pred_check_branch
          %216 = sbr.rel (%p214) target = $region40
        $region39: #{c16_forward_folded.1} parent=31 // pred_region
          %217 = dma.done %s210, 8192
        $region40: #{c16_forward_folded.1} parent=31 // pred_fallthru
          _
        %s218 = sand.u32 %s43, 1
        %s219 = scalar_lea.sflag [#allocation4], %s218
        %s220 = sand.u32 %s43, 1
        %s221 = smul.addr %s220, 64
        %s222 = scalar_lea.vmem [#allocation3], %s221
        %p223 = pneg %p56
        %p224 = pneg %p53
        %s225 = sand.u32 %s69, 1
        %s226 = scalar_lea.sflag [#allocation7], %s225
        %s227 = sand.u32 %s69, 1
        %s228 = smul.addr %s227, 512
        %s229 = scalar_lea.vmem [#allocation6], %s228
        %p230 = pneg %p82
        %p231 = pneg %p79
        %p232 = pneg %p103
        %p233 = pneg %p100
        %p234 = pneg %p129
        %p235 = pneg %p126
        %s236 = smul.u32 8, %s26
        %s237 = smul.u32 128, %s26
        %p239 = scmp.eq.s32.totalorder %s26, 0
        // Predicated region
        $region41: #{c16_forward_folded.1} parent=31 // pred_check
          %p240 = pneg %p239
        $region42: #{c16_forward_folded.1} parent=31 // pred_check_branch
          %242 = sbr.rel (%p240) target = $region44
        $region43: #{c16_forward_folded.1} parent=31 // pred_region
          %243 = vst [vmem:[#allocation2] sm:$0xff] 0.0
        $region44: #{c16_forward_folded.1} parent=31 // pred_fallthru
          _
        %v244 = vld [vmem:[#allocation2] sm:$0xff]
        %v245 = vld [vmem:[%s204] sm:$0xff]
        %v246 = vld [vmem:[%s204 + $0x8] sm:$0xff]
        %v247 = vld [vmem:[%s204 + $0x10] sm:$0xff]
        %v248 = vld [vmem:[%s204 + $0x18] sm:$0xff]
        %v249 = vld [vmem:[%s204 + $0x20] sm:$0xff]
        %v250 = vld [vmem:[%s204 + $0x28] sm:$0xff]
        %v251 = vld [vmem:[%s204 + $0x30] sm:$0xff]
        %v252 = vld [vmem:[%s204 + $0x38] sm:$0xff]
        %v253 = vpack.c.bf16 %v245, %v245
        %v254 = vpack.c.bf16 %v246, %v246
        %v255 = vpack.c.bf16 %v247, %v247
        %v256 = vpack.c.bf16 %v248, %v248
        %v257 = vpack.c.bf16 %v249, %v249
        %v258 = vpack.c.bf16 %v250, %v250
        %v259 = vpack.c.bf16 %v251, %v251
        %v260 = vpack.c.bf16 %v252, %v252
        %v261 = vld [vmem:[%s213] sm:$0xf]
        %v262 = vld [vmem:[%s213 + $0x4] sm:$0xf]
        %v263 = vld [vmem:[%s213 + $0x8] sm:$0xf]
        %v264 = vld [vmem:[%s213 + $0xc] sm:$0xf]
        %v265 = vld [vmem:[%s213 + $0x10] sm:$0xf]
        %v266 = vld [vmem:[%s213 + $0x14] sm:$0xf]
        %v267 = vld [vmem:[%s213 + $0x18] sm:$0xf]
        %v268 = vld [vmem:[%s213 + $0x1c] sm:$0xf]
        %v269 = vld [vmem:[%s213 + $0x20] sm:$0xf]
        %v270 = vld [vmem:[%s213 + $0x24] sm:$0xf]
        %v271 = vld [vmem:[%s213 + $0x28] sm:$0xf]
        %v272 = vld [vmem:[%s213 + $0x2c] sm:$0xf]
        %v273 = vld [vmem:[%s213 + $0x30] sm:$0xf]
        %v274 = vld [vmem:[%s213 + $0x34] sm:$0xf]
        %v275 = vld [vmem:[%s213 + $0x38] sm:$0xf]
        %v276 = vld [vmem:[%s213 + $0x3c] sm:$0xf]
        %v277 = vld [vmem:[%s213 + $0x40] sm:$0xf]
        %v278 = vld [vmem:[%s213 + $0x44] sm:$0xf]
        %v279 = vld [vmem:[%s213 + $0x48] sm:$0xf]
        %v280 = vld [vmem:[%s213 + $0x4c] sm:$0xf]
        %v281 = vld [vmem:[%s213 + $0x50] sm:$0xf]
        %v282 = vld [vmem:[%s213 + $0x54] sm:$0xf]
        %v283 = vld [vmem:[%s213 + $0x58] sm:$0xf]
        %v284 = vld [vmem:[%s213 + $0x5c] sm:$0xf]
        %v285 = vld [vmem:[%s213 + $0x60] sm:$0xf]
        %v286 = vld [vmem:[%s213 + $0x64] sm:$0xf]
        %v287 = vld [vmem:[%s213 + $0x68] sm:$0xf]
        %v288 = vld [vmem:[%s213 + $0x6c] sm:$0xf]
        %v289 = vld [vmem:[%s213 + $0x70] sm:$0xf]
        %v290 = vld [vmem:[%s213 + $0x74] sm:$0xf]
        %v291 = vld [vmem:[%s213 + $0x78] sm:$0xf]
        %v292 = vld [vmem:[%s213 + $0x7c] sm:$0xf]
        %v293 = vld [vmem:[%s213 + $0x80] sm:$0xf]
        %v294 = vld [vmem:[%s213 + $0x84] sm:$0xf]
        %v295 = vld [vmem:[%s213 + $0x88] sm:$0xf]
        %v296 = vld [vmem:[%s213 + $0x8c] sm:$0xf]
        %v297 = vld [vmem:[%s213 + $0x90] sm:$0xf]
        %v298 = vld [vmem:[%s213 + $0x94] sm:$0xf]
        %v299 = vld [vmem:[%s213 + $0x98] sm:$0xf]
        %v300 = vld [vmem:[%s213 + $0x9c] sm:$0xf]
        %v301 = vld [vmem:[%s213 + $0xa0] sm:$0xf]
        %v302 = vld [vmem:[%s213 + $0xa4] sm:$0xf]
        %v303 = vld [vmem:[%s213 + $0xa8] sm:$0xf]
        %v304 = vld [vmem:[%s213 + $0xac] sm:$0xf]
        %v305 = vld [vmem:[%s213 + $0xb0] sm:$0xf]
        %v306 = vld [vmem:[%s213 + $0xb4] sm:$0xf]
        %v307 = vld [vmem:[%s213 + $0xb8] sm:$0xf]
        %v308 = vld [vmem:[%s213 + $0xbc] sm:$0xf]
        %v309 = vld [vmem:[%s213 + $0xc0] sm:$0xf]
        %v310 = vld [vmem:[%s213 + $0xc4] sm:$0xf]
        %v311 = vld [vmem:[%s213 + $0xc8] sm:$0xf]
        %v312 = vld [vmem:[%s213 + $0xcc] sm:$0xf]
        %v313 = vld [vmem:[%s213 + $0xd0] sm:$0xf]
        %v314 = vld [vmem:[%s213 + $0xd4] sm:$0xf]
        %v315 = vld [vmem:[%s213 + $0xd8] sm:$0xf]
        %v316 = vld [vmem:[%s213 + $0xdc] sm:$0xf]
        %v317 = vld [vmem:[%s213 + $0xe0] sm:$0xf]
        %v318 = vld [vmem:[%s213 + $0xe4] sm:$0xf]
        %v319 = vld [vmem:[%s213 + $0xe8] sm:$0xf]
        %v320 = vld [vmem:[%s213 + $0xec] sm:$0xf]
        %v321 = vld [vmem:[%s213 + $0xf0] sm:$0xf]
        %v322 = vld [vmem:[%s213 + $0xf4] sm:$0xf]
        %v323 = vld [vmem:[%s213 + $0xf8] sm:$0xf]
        %v324 = vld [vmem:[%s213 + $0xfc] sm:$0xf]
        %v325 = vld [vmem:[%s213 + $0x100] sm:$0xf]
        %v326 = vld [vmem:[%s213 + $0x104] sm:$0xf]
        %v327 = vld [vmem:[%s213 + $0x108] sm:$0xf]
        %v328 = vld [vmem:[%s213 + $0x10c] sm:$0xf]
        %v329 = vld [vmem:[%s213 + $0x110] sm:$0xf]
        %v330 = vld [vmem:[%s213 + $0x114] sm:$0xf]
        %v331 = vld [vmem:[%s213 + $0x118] sm:$0xf]
        %v332 = vld [vmem:[%s213 + $0x11c] sm:$0xf]
        %v333 = vld [vmem:[%s213 + $0x120] sm:$0xf]
        %v334 = vld [vmem:[%s213 + $0x124] sm:$0xf]
        %v335 = vld [vmem:[%s213 + $0x128] sm:$0xf]
        %v336 = vld [vmem:[%s213 + $0x12c] sm:$0xf]
        %v337 = vld [vmem:[%s213 + $0x130] sm:$0xf]
        %v338 = vld [vmem:[%s213 + $0x134] sm:$0xf]
        %v339 = vld [vmem:[%s213 + $0x138] sm:$0xf]
        %v340 = vld [vmem:[%s213 + $0x13c] sm:$0xf]
        %v341 = vld [vmem:[%s213 + $0x140] sm:$0xf]
        %v342 = vld [vmem:[%s213 + $0x144] sm:$0xf]
        %v343 = vld [vmem:[%s213 + $0x148] sm:$0xf]
        %v344 = vld [vmem:[%s213 + $0x14c] sm:$0xf]
        %v345 = vld [vmem:[%s213 + $0x150] sm:$0xf]
        %v346 = vld [vmem:[%s213 + $0x154] sm:$0xf]
        %v347 = vld [vmem:[%s213 + $0x158] sm:$0xf]
        %v348 = vld [vmem:[%s213 + $0x15c] sm:$0xf]
        %v349 = vld [vmem:[%s213 + $0x160] sm:$0xf]
        %v350 = vld [vmem:[%s213 + $0x164] sm:$0xf]
        %v351 = vld [vmem:[%s213 + $0x168] sm:$0xf]
        %v352 = vld [vmem:[%s213 + $0x16c] sm:$0xf]
        %v353 = vld [vmem:[%s213 + $0x170] sm:$0xf]
        %v354 = vld [vmem:[%s213 + $0x174] sm:$0xf]
        %v355 = vld [vmem:[%s213 + $0x178] sm:$0xf]
        %v356 = vld [vmem:[%s213 + $0x17c] sm:$0xf]
        %v357 = vld [vmem:[%s213 + $0x180] sm:$0xf]
        %v358 = vld [vmem:[%s213 + $0x184] sm:$0xf]
        %v359 = vld [vmem:[%s213 + $0x188] sm:$0xf]
        %v360 = vld [vmem:[%s213 + $0x18c] sm:$0xf]
        %v361 = vld [vmem:[%s213 + $0x190] sm:$0xf]
        %v362 = vld [vmem:[%s213 + $0x194] sm:$0xf]
        %v363 = vld [vmem:[%s213 + $0x198] sm:$0xf]
        %v364 = vld [vmem:[%s213 + $0x19c] sm:$0xf]
        %v365 = vld [vmem:[%s213 + $0x1a0] sm:$0xf]
        %v366 = vld [vmem:[%s213 + $0x1a4] sm:$0xf]
        %v367 = vld [vmem:[%s213 + $0x1a8] sm:$0xf]
        %v368 = vld [vmem:[%s213 + $0x1ac] sm:$0xf]
        %v369 = vld [vmem:[%s213 + $0x1b0] sm:$0xf]
        %v370 = vld [vmem:[%s213 + $0x1b4] sm:$0xf]
        %v371 = vld [vmem:[%s213 + $0x1b8] sm:$0xf]
        %v372 = vld [vmem:[%s213 + $0x1bc] sm:$0xf]
        %v373 = vld [vmem:[%s213 + $0x1c0] sm:$0xf]
        %v374 = vld [vmem:[%s213 + $0x1c4] sm:$0xf]
        %v375 = vld [vmem:[%s213 + $0x1c8] sm:$0xf]
        %v376 = vld [vmem:[%s213 + $0x1cc] sm:$0xf]
        %v377 = vld [vmem:[%s213 + $0x1d0] sm:$0xf]
        %v378 = vld [vmem:[%s213 + $0x1d4] sm:$0xf]
        %v379 = vld [vmem:[%s213 + $0x1d8] sm:$0xf]
        %v380 = vld [vmem:[%s213 + $0x1dc] sm:$0xf]
        %v381 = vld [vmem:[%s213 + $0x1e0] sm:$0xf]
        %v382 = vld [vmem:[%s213 + $0x1e4] sm:$0xf]
        %v383 = vld [vmem:[%s213 + $0x1e8] sm:$0xf]
        %v384 = vld [vmem:[%s213 + $0x1ec] sm:$0xf]
        %v385 = vld [vmem:[%s213 + $0x1f0] sm:$0xf]
        %v386 = vld [vmem:[%s213 + $0x1f4] sm:$0xf]
        %v387 = vld [vmem:[%s213 + $0x1f8] sm:$0xf]
        %v388 = vld [vmem:[%s213 + $0x1fc] sm:$0xf]
        %v517 = vunpack.c.l.b16 %v261
        %v518 = vunpack.c.l.b16 %v262
        %v519 = vunpack.c.l.b16 %v263
        %v520 = vunpack.c.l.b16 %v264
        %v521 = vunpack.c.l.b16 %v265
        %v522 = vunpack.c.l.b16 %v266
        %v523 = vunpack.c.l.b16 %v267
        %v524 = vunpack.c.l.b16 %v268
        %v525 = vunpack.c.l.b16 %v269
        %v526 = vunpack.c.l.b16 %v270
        %v527 = vunpack.c.l.b16 %v271
        %v528 = vunpack.c.l.b16 %v272
        %v529 = vunpack.c.l.b16 %v273
        %v530 = vunpack.c.l.b16 %v274
        %v531 = vunpack.c.l.b16 %v275
        %v532 = vunpack.c.l.b16 %v276
        %v533 = vunpack.c.l.b16 %v277
        %v534 = vunpack.c.l.b16 %v278
        %v535 = vunpack.c.l.b16 %v279
        %v536 = vunpack.c.l.b16 %v280
        %v537 = vunpack.c.l.b16 %v281
        %v538 = vunpack.c.l.b16 %v282
        %v539 = vunpack.c.l.b16 %v283
        %v540 = vunpack.c.l.b16 %v284
        %v541 = vunpack.c.l.b16 %v285
        %v542 = vunpack.c.l.b16 %v286
        %v543 = vunpack.c.l.b16 %v287
        %v544 = vunpack.c.l.b16 %v288
        %v545 = vunpack.c.l.b16 %v289
        %v546 = vunpack.c.l.b16 %v290
        %v547 = vunpack.c.l.b16 %v291
        %v548 = vunpack.c.l.b16 %v292
        %v549 = vunpack.c.l.b16 %v293
        %v550 = vunpack.c.l.b16 %v294
        %v551 = vunpack.c.l.b16 %v295
        %v552 = vunpack.c.l.b16 %v296
        %v553 = vunpack.c.l.b16 %v297
        %v554 = vunpack.c.l.b16 %v298
        %v555 = vunpack.c.l.b16 %v299
        %v556 = vunpack.c.l.b16 %v300
        %v557 = vunpack.c.l.b16 %v301
        %v558 = vunpack.c.l.b16 %v302
        %v559 = vunpack.c.l.b16 %v303
        %v560 = vunpack.c.l.b16 %v304
        %v561 = vunpack.c.l.b16 %v305
        %v562 = vunpack.c.l.b16 %v306
        %v563 = vunpack.c.l.b16 %v307
        %v564 = vunpack.c.l.b16 %v308
        %v565 = vunpack.c.l.b16 %v309
        %v566 = vunpack.c.l.b16 %v310
        %v567 = vunpack.c.l.b16 %v311
        %v568 = vunpack.c.l.b16 %v312
        %v569 = vunpack.c.l.b16 %v313
        %v570 = vunpack.c.l.b16 %v314
        %v571 = vunpack.c.l.b16 %v315
        %v572 = vunpack.c.l.b16 %v316
        %v573 = vunpack.c.l.b16 %v317
        %v574 = vunpack.c.l.b16 %v318
        %v575 = vunpack.c.l.b16 %v319
        %v576 = vunpack.c.l.b16 %v320
        %v577 = vunpack.c.l.b16 %v321
        %v578 = vunpack.c.l.b16 %v322
        %v579 = vunpack.c.l.b16 %v323
        %v580 = vunpack.c.l.b16 %v324
        %v581 = vunpack.c.l.b16 %v325
        %v582 = vunpack.c.l.b16 %v326
        %v583 = vunpack.c.l.b16 %v327
        %v584 = vunpack.c.l.b16 %v328
        %v585 = vunpack.c.l.b16 %v329
        %v586 = vunpack.c.l.b16 %v330
        %v587 = vunpack.c.l.b16 %v331
        %v588 = vunpack.c.l.b16 %v332
        %v589 = vunpack.c.l.b16 %v333
        %v590 = vunpack.c.l.b16 %v334
        %v591 = vunpack.c.l.b16 %v335
        %v592 = vunpack.c.l.b16 %v336
        %v593 = vunpack.c.l.b16 %v337
        %v594 = vunpack.c.l.b16 %v338
        %v595 = vunpack.c.l.b16 %v339
        %v596 = vunpack.c.l.b16 %v340
        %v597 = vunpack.c.l.b16 %v341
        %v598 = vunpack.c.l.b16 %v342
        %v599 = vunpack.c.l.b16 %v343
        %v600 = vunpack.c.l.b16 %v344
        %v601 = vunpack.c.l.b16 %v345
        %v602 = vunpack.c.l.b16 %v346
        %v603 = vunpack.c.l.b16 %v347
        %v604 = vunpack.c.l.b16 %v348
        %v605 = vunpack.c.l.b16 %v349
        %v606 = vunpack.c.l.b16 %v350
        %v607 = vunpack.c.l.b16 %v351
        %v608 = vunpack.c.l.b16 %v352
        %v609 = vunpack.c.l.b16 %v353
        %v610 = vunpack.c.l.b16 %v354
        %v611 = vunpack.c.l.b16 %v355
        %v612 = vunpack.c.l.b16 %v356
        %v613 = vunpack.c.l.b16 %v357
        %v614 = vunpack.c.l.b16 %v358
        %v615 = vunpack.c.l.b16 %v359
        %v616 = vunpack.c.l.b16 %v360
        %v617 = vunpack.c.l.b16 %v361
        %v618 = vunpack.c.l.b16 %v362
        %v619 = vunpack.c.l.b16 %v363
        %v620 = vunpack.c.l.b16 %v364
        %v621 = vunpack.c.l.b16 %v365
        %v622 = vunpack.c.l.b16 %v366
        %v623 = vunpack.c.l.b16 %v367
        %v624 = vunpack.c.l.b16 %v368
        %v625 = vunpack.c.l.b16 %v369
        %v626 = vunpack.c.l.b16 %v370
        %v627 = vunpack.c.l.b16 %v371
        %v628 = vunpack.c.l.b16 %v372
        %v629 = vunpack.c.l.b16 %v373
        %v630 = vunpack.c.l.b16 %v374
        %v631 = vunpack.c.l.b16 %v375
        %v632 = vunpack.c.l.b16 %v376
        %v633 = vunpack.c.l.b16 %v377
        %v634 = vunpack.c.l.b16 %v378
        %v635 = vunpack.c.l.b16 %v379
        %v636 = vunpack.c.l.b16 %v380
        %v637 = vunpack.c.l.b16 %v381
        %v638 = vunpack.c.l.b16 %v382
        %v639 = vunpack.c.l.b16 %v383
        %v640 = vunpack.c.l.b16 %v384
        %v641 = vunpack.c.l.b16 %v385
        %v642 = vunpack.c.l.b16 %v386
        %v643 = vunpack.c.l.b16 %v387
        %v644 = vunpack.c.l.b16 %v388
        %v645 = vpack.c.b16 %v518, %v517
        %v646 = vpack.c.b16 %v520, %v519
        %v647 = vpack.c.b16 %v522, %v521
        %v648 = vpack.c.b16 %v524, %v523
        %v649 = vpack.c.b16 %v526, %v525
        %v650 = vpack.c.b16 %v528, %v527
        %v651 = vpack.c.b16 %v530, %v529
        %v652 = vpack.c.b16 %v532, %v531
        %v653 = vpack.c.b16 %v534, %v533
        %v654 = vpack.c.b16 %v536, %v535
        %v655 = vpack.c.b16 %v538, %v537
        %v656 = vpack.c.b16 %v540, %v539
        %v657 = vpack.c.b16 %v542, %v541
        %v658 = vpack.c.b16 %v544, %v543
        %v659 = vpack.c.b16 %v546, %v545
        %v660 = vpack.c.b16 %v548, %v547
        %v661 = vpack.c.b16 %v550, %v549
        %v662 = vpack.c.b16 %v552, %v551
        %v663 = vpack.c.b16 %v554, %v553
        %v664 = vpack.c.b16 %v556, %v555
        %v665 = vpack.c.b16 %v558, %v557
        %v666 = vpack.c.b16 %v560, %v559
        %v667 = vpack.c.b16 %v562, %v561
        %v668 = vpack.c.b16 %v564, %v563
        %v669 = vpack.c.b16 %v566, %v565
        %v670 = vpack.c.b16 %v568, %v567
        %v671 = vpack.c.b16 %v570, %v569
        %v672 = vpack.c.b16 %v572, %v571
        %v673 = vpack.c.b16 %v574, %v573
        %v674 = vpack.c.b16 %v576, %v575
        %v675 = vpack.c.b16 %v578, %v577
        %v676 = vpack.c.b16 %v580, %v579
        %v677 = vpack.c.b16 %v582, %v581
        %v678 = vpack.c.b16 %v584, %v583
        %v679 = vpack.c.b16 %v586, %v585
        %v680 = vpack.c.b16 %v588, %v587
        %v681 = vpack.c.b16 %v590, %v589
        %v682 = vpack.c.b16 %v592, %v591
        %v683 = vpack.c.b16 %v594, %v593
        %v684 = vpack.c.b16 %v596, %v595
        %v685 = vpack.c.b16 %v598, %v597
        %v686 = vpack.c.b16 %v600, %v599
        %v687 = vpack.c.b16 %v602, %v601
        %v688 = vpack.c.b16 %v604, %v603
        %v689 = vpack.c.b16 %v606, %v605
        %v690 = vpack.c.b16 %v608, %v607
        %v691 = vpack.c.b16 %v610, %v609
        %v692 = vpack.c.b16 %v612, %v611
        %v693 = vpack.c.b16 %v614, %v613
        %v694 = vpack.c.b16 %v616, %v615
        %v695 = vpack.c.b16 %v618, %v617
        %v696 = vpack.c.b16 %v620, %v619
        %v697 = vpack.c.b16 %v622, %v621
        %v698 = vpack.c.b16 %v624, %v623
        %v699 = vpack.c.b16 %v626, %v625
        %v700 = vpack.c.b16 %v628, %v627
        %v701 = vpack.c.b16 %v630, %v629
        %v702 = vpack.c.b16 %v632, %v631
        %v703 = vpack.c.b16 %v634, %v633
        %v704 = vpack.c.b16 %v636, %v635
        %v705 = vpack.c.b16 %v638, %v637
        %v706 = vpack.c.b16 %v640, %v639
        %v707 = vpack.c.b16 %v642, %v641
        %v708 = vpack.c.b16 %v644, %v643
        %773 = vmatprep.subr.bf16.mxu0 0
        %774 = vmatpush1.bf16.msra.mxu0 %v645
        %775 = vmatprep.subr.bf16.mxu0 0
        %776 = vmatpush1.bf16.msra.mxu0 %v646
        %777 = vmatprep.subr.bf16.mxu0 0
        %778 = vmatpush1.bf16.msra.mxu0 %v647
        %779 = vmatprep.subr.bf16.mxu0 0
        %780 = vmatpush1.bf16.msra.mxu0 %v648
        %781 = vmatprep.subr.bf16.mxu0 0
        %782 = vmatpush1.bf16.msra.mxu0 %v649
        %783 = vmatprep.subr.bf16.mxu0 0
        %784 = vmatpush1.bf16.msra.mxu0 %v650
        %785 = vmatprep.subr.bf16.mxu0 0
        %786 = vmatpush1.bf16.msra.mxu0 %v651
        %787 = vmatprep.subr.bf16.mxu0 0
        %788 = vmatpush1.bf16.msra.mxu0 %v652
        %789 = vmatprep.subr.bf16.mxu0 0
        %790 = vmatpush1.bf16.msra.mxu0 %v653
        %791 = vmatprep.subr.bf16.mxu0 0
        %792 = vmatpush1.bf16.msra.mxu0 %v654
        %793 = vmatprep.subr.bf16.mxu0 0
        %794 = vmatpush1.bf16.msra.mxu0 %v655
        %795 = vmatprep.subr.bf16.mxu0 0
        %796 = vmatpush1.bf16.msra.mxu0 %v656
        %797 = vmatprep.subr.bf16.mxu0 0
        %798 = vmatpush1.bf16.msra.mxu0 %v657
        %799 = vmatprep.subr.bf16.mxu0 0
        %800 = vmatpush1.bf16.msra.mxu0 %v658
        %801 = vmatprep.subr.bf16.mxu0 0
        %802 = vmatpush1.bf16.msra.mxu0 %v659
        %803 = vmatprep.subr.bf16.mxu0 0
        %804 = vmatpush1.bf16.msra.mxu0 %v660
        %805 = vmatprep.mubr.bf16.mxu0 %v254
        %806 = vmatmul.mubr.bf16.gmra.mrb[0].mxu0 %v253
        %v807 = vpop.f32.mrb[0].mxu0
        %v808 = vadd.f32 0.0, %v807
        %v809 = vpop.f32.mrb[0].mxu0
        %v810 = vpop.f32.mrb[0].mxu0
        %v811 = vpop.f32.mrb[0].mxu0
        %812 = vdwg.mxu0
        %813 = vmatprep.subr.bf16.mxu0 0
        %814 = vmatpush1.bf16.msra.mxu0 %v661
        %815 = vmatprep.subr.bf16.mxu0 0
        %816 = vmatpush1.bf16.msra.mxu0 %v662
        %817 = vmatprep.subr.bf16.mxu0 0
        %818 = vmatpush1.bf16.msra.mxu0 %v663
        %819 = vmatprep.subr.bf16.mxu0 0
        %820 = vmatpush1.bf16.msra.mxu0 %v664
        %821 = vmatprep.subr.bf16.mxu0 0
        %822 = vmatpush1.bf16.msra.mxu0 %v665
        %823 = vmatprep.subr.bf16.mxu0 0
        %824 = vmatpush1.bf16.msra.mxu0 %v666
        %825 = vmatprep.subr.bf16.mxu0 0
        %826 = vmatpush1.bf16.msra.mxu0 %v667
        %827 = vmatprep.subr.bf16.mxu0 0
        %828 = vmatpush1.bf16.msra.mxu0 %v668
        %829 = vmatprep.subr.bf16.mxu0 0
        %830 = vmatpush1.bf16.msra.mxu0 %v669
        %831 = vmatprep.subr.bf16.mxu0 0
        %832 = vmatpush1.bf16.msra.mxu0 %v670
        %833 = vmatprep.subr.bf16.mxu0 0
        %834 = vmatpush1.bf16.msra.mxu0 %v671
        %835 = vmatprep.subr.bf16.mxu0 0
        %836 = vmatpush1.bf16.msra.mxu0 %v672
        %837 = vmatprep.subr.bf16.mxu0 0
        %838 = vmatpush1.bf16.msra.mxu0 %v673
        %839 = vmatprep.subr.bf16.mxu0 0
        %840 = vmatpush1.bf16.msra.mxu0 %v674
        %841 = vmatprep.subr.bf16.mxu0 0
        %842 = vmatpush1.bf16.msra.mxu0 %v675
        %843 = vmatprep.subr.bf16.mxu0 0
        %844 = vmatpush1.bf16.msra.mxu0 %v676
        %845 = vmatprep.mubr.bf16.mxu0 %v256
        %846 = vmatmul.mubr.bf16.gmra.mrb[0].mxu0 %v255
        %v847 = vpop.f32.mrb[0].mxu0
        %v848 = vadd.f32 %v808, %v847
        %v849 = vpop.f32.mrb[0].mxu0
        %v850 = vpop.f32.mrb[0].mxu0
        %v851 = vpop.f32.mrb[0].mxu0
        %852 = vdwg.mxu0
        %853 = vmatprep.subr.bf16.mxu0 0
        %854 = vmatpush1.bf16.msra.mxu0 %v677
        %855 = vmatprep.subr.bf16.mxu0 0
        %856 = vmatpush1.bf16.msra.mxu0 %v678
        %857 = vmatprep.subr.bf16.mxu0 0
        %858 = vmatpush1.bf16.msra.mxu0 %v679
        %859 = vmatprep.subr.bf16.mxu0 0
        %860 = vmatpush1.bf16.msra.mxu0 %v680
        %861 = vmatprep.subr.bf16.mxu0 0
        %862 = vmatpush1.bf16.msra.mxu0 %v681
        %863 = vmatprep.subr.bf16.mxu0 0
        %864 = vmatpush1.bf16.msra.mxu0 %v682
        %865 = vmatprep.subr.bf16.mxu0 0
        %866 = vmatpush1.bf16.msra.mxu0 %v683
        %867 = vmatprep.subr.bf16.mxu0 0
        %868 = vmatpush1.bf16.msra.mxu0 %v684
        %869 = vmatprep.subr.bf16.mxu0 0
        %870 = vmatpush1.bf16.msra.mxu0 %v685
        %871 = vmatprep.subr.bf16.mxu0 0
        %872 = vmatpush1.bf16.msra.mxu0 %v686
        %873 = vmatprep.subr.bf16.mxu0 0
        %874 = vmatpush1.bf16.msra.mxu0 %v687
        %875 = vmatprep.subr.bf16.mxu0 0
        %876 = vmatpush1.bf16.msra.mxu0 %v688
        %877 = vmatprep.subr.bf16.mxu0 0
        %878 = vmatpush1.bf16.msra.mxu0 %v689
        %879 = vmatprep.subr.bf16.mxu0 0
        %880 = vmatpush1.bf16.msra.mxu0 %v690
        %881 = vmatprep.subr.bf16.mxu0 0
        %882 = vmatpush1.bf16.msra.mxu0 %v691
        %883 = vmatprep.subr.bf16.mxu0 0
        %884 = vmatpush1.bf16.msra.mxu0 %v692
        %885 = vmatprep.mubr.bf16.mxu0 %v258
        %886 = vmatmul.mubr.bf16.gmra.mrb[0].mxu0 %v257
        %v887 = vpop.f32.mrb[0].mxu0
        %v888 = vadd.f32 %v848, %v887
        %v889 = vpop.f32.mrb[0].mxu0
        %v890 = vpop.f32.mrb[0].mxu0
        %v891 = vpop.f32.mrb[0].mxu0
        %892 = vdwg.mxu0
        %893 = vmatprep.subr.bf16.mxu0 0
        %894 = vmatpush1.bf16.msra.mxu0 %v693
        %895 = vmatprep.subr.bf16.mxu0 0
        %896 = vmatpush1.bf16.msra.mxu0 %v694
        %897 = vmatprep.subr.bf16.mxu0 0
        %898 = vmatpush1.bf16.msra.mxu0 %v695
        %899 = vmatprep.subr.bf16.mxu0 0
        %900 = vmatpush1.bf16.msra.mxu0 %v696
        %901 = vmatprep.subr.bf16.mxu0 0
        %902 = vmatpush1.bf16.msra.mxu0 %v697
        %903 = vmatprep.subr.bf16.mxu0 0
        %904 = vmatpush1.bf16.msra.mxu0 %v698
        %905 = vmatprep.subr.bf16.mxu0 0
        %906 = vmatpush1.bf16.msra.mxu0 %v699
        %907 = vmatprep.subr.bf16.mxu0 0
        %908 = vmatpush1.bf16.msra.mxu0 %v700
        %909 = vmatprep.subr.bf16.mxu0 0
        %910 = vmatpush1.bf16.msra.mxu0 %v701
        %911 = vmatprep.subr.bf16.mxu0 0
        %912 = vmatpush1.bf16.msra.mxu0 %v702
        %913 = vmatprep.subr.bf16.mxu0 0
        %914 = vmatpush1.bf16.msra.mxu0 %v703
        %915 = vmatprep.subr.bf16.mxu0 0
        %916 = vmatpush1.bf16.msra.mxu0 %v704
        %917 = vmatprep.subr.bf16.mxu0 0
        %918 = vmatpush1.bf16.msra.mxu0 %v705
        %919 = vmatprep.subr.bf16.mxu0 0
        %920 = vmatpush1.bf16.msra.mxu0 %v706
        %921 = vmatprep.subr.bf16.mxu0 0
        %922 = vmatpush1.bf16.msra.mxu0 %v707
        %923 = vmatprep.subr.bf16.mxu0 0
        %924 = vmatpush1.bf16.msra.mxu0 %v708
        %925 = vmatprep.mubr.bf16.mxu0 %v260
        %926 = vmatmul.mubr.bf16.gmra.mrb[0].mxu0 %v259
        %v927 = vpop.f32.mrb[0].mxu0
        %v928 = vadd.f32 %v888, %v927
        %v929 = vpop.f32.mrb[0].mxu0
        %v930 = vpop.f32.mrb[0].mxu0
        %v931 = vpop.f32.mrb[0].mxu0
        %932 = vdwg.mxu0
        %v933 = vadd.f32 %v244, %v928
        %934 = vst [vmem:[#allocation2] sm:$0xff] %v933
        %p935 = scmp.eq.s32.totalorder %s26, 1
        // Predicated region
        $region45: #{c16_forward_folded.1} parent=31 // pred_check
          %p936 = pneg %p935
        $region46: #{c16_forward_folded.1} parent=31 // pred_check_branch
          %938 = sbr.rel (%p936) target = $region48
        $region47: #{c16_forward_folded.1} parent=31 // pred_region
          %v939 = vld [vmem:[#allocation2] sm:$0xff]
          %v940 = vld [vmem:[%s2] sm:$0x1]
          %v942 = vlaneseq
          %v943 = vshrl.u32 %v942, 7
          %v944 = vsub.s32 0, %v943
          %v945 = vrot.slane %v940, %v944
          %v947 = vadd.f32 %v939, %v945
          %948 = vst [vmem:[#allocation8] sm:$0xff] %v947
        $region48: #{c16_forward_folded.1} parent=31 // pred_fallthru
          _
        // Predicated region
        $region49: #{c16_forward_folded.1} parent=31 // pred_check
          %p949 = pneg %p126
        $region50: #{c16_forward_folded.1} parent=31 // pred_check_branch
          %951 = sbr.rel (%p949) target = $region52
        $region51: #{c16_forward_folded.1} parent=31 // pred_region
          %s953 = ssub.s32 128, 128
          %954 = vsyncadd [#allocation5], %s953
          %s955 = smul.addr %s25, 128
          %s956 = scalar_lea.hbm %s3, %s955
          %s958 = sshll.u32 [#allocation8], 4
          %s959 = int_to_ptr.vmem [resolvable:$true] %s958
          %961 = dma.vmem_to_hbm [thread:$0]  %s959, 128, %s956, [#allocation5]
        $region52: #{c16_forward_folded.1} parent=31 // pred_fallthru
          _
        // Predicated region
        $region53: #{c16_forward_folded.1} parent=31 // pred_check
          %p962 = pneg %p126
        $region54: #{c16_forward_folded.1} parent=31 // pred_check_branch
          %964 = sbr.rel (%p962) target = $region56
        $region55: #{c16_forward_folded.1} parent=31 // pred_region
          %965 = dma.done [#allocation5], 128
        $region56: #{c16_forward_folded.1} parent=31 // pred_fallthru
          _
      $region32: #{c16_forward_folded.1} parent=5 // pred_fallthru
        _
      %p966 = scmp.le.s32.totalorder 2, %s16
      // Predicated region
      $region57: #{c16_forward_folded.1} parent=5 // pred_check
        %p967 = pneg %p966
      $region58: #{c16_forward_folded.1} parent=5 // pred_check_branch
        %969 = sbr.rel (%p967) target = $region60
      $region59: #{c16_forward_folded.1} parent=5 // pred_region
        %s970 = ssub.s32 %s16, 2
      $region60: #{c16_forward_folded.1} parent=5 // pred_fallthru
        _
    $region6: #{c16_forward_folded.1} parent=1 // loop_footer
      %s20 = sadd.s32 1, %s16
    $region7: #{c16_forward_folded.1} parent=1 // loop_footer_branch
      %15 = sbr.rel target = $region3
    $region8: #{c16_forward_folded.1} parent=1 // loop_exit
      _
    %971 = vsyncpa [#allocation4], 1
    %s972 = scalar_lea.sflag [#allocation4], 1
    %973 = vsyncpa %s972, 1
    %974 = vsyncpa [#allocation7], 1
    %s975 = scalar_lea.sflag [#allocation7], 1
    %976 = vsyncpa %s975, 1
    %977 = vsyncpa [#allocation5], 1
    %s978 = scalar_lea.sflag [#allocation5], 1
    %979 = vsyncpa %s978, 1

</llo_original>
